<compile_context>
chip_gen: v6e
topology: v6e:2x2x1
jax: 0.10.0
libtpu: 0.0.40
codegen_flags: <defaults>
</compile_context>

<pallas_src>
import functools

import jax
import jax.numpy as jnp
from jax.experimental import pallas as pl
from jax.experimental.pallas import tpu as pltpu


def _round_up(x, m):
    return (x + m - 1) // m * m


def _pad_dim(d):
    """Pad a layer dim: 128 floor (MXU/lane minimum); 256-multiples for big dims
    so v6e/v7x's 256x256 MXU tiles are filled (128-multiples are already optimal
    on v5e's 4x128x128 MXU and padding tiny dims to 256 would only add zeros)."""
    if d <= 128:
        return 128
    return _round_up(d, 256)


# ---------------------------------------------------------------------------
# Kernel
# ---------------------------------------------------------------------------

def _actor_mlp_kernel(layer_meta, matmul_dtype, x_ref, w_ref, b_ref, o_ref):
    """Fused MLP forward over one batch tile.

    x_ref: (TM, Kpad0) f32 activations tile.
    w_ref: (sum_i Kpad_i, max_i Npad_i) bf16 packed weight slab (VMEM resident).
           Layer i occupies rows [roff_i, roff_i + Kpad_i), cols [0, Npad_i).
    b_ref: (8 * n_layers, max_i Npad_i) f32 bias slab; bias of layer i is row 8*i.
    o_ref: (TM, Npad_last) f32 lane-dense output tile (real cols sliced outside).
    """
    n_layers = len(layer_meta)
    h = x_ref[...]                                           # (TM, Kpad0) f32
    for i, (roff, kpad, npad) in enumerate(layer_meta):
        w = w_ref[roff:roff + kpad, :npad]                   # bf16, tile-aligned view
        b = b_ref[8 * i:8 * i + 1, :npad]                    # (1, Npad_i) f32
        # bf16 operands at the MXU, f32 accumulation; bias add / ReLU stay f32 on VPU.
        h = jnp.dot(h.astype(matmul_dtype), w,
                    preferred_element_type=jnp.float32) + b
        if i < n_layers - 1:
            h = jnp.maximum(h, 0.0)                          # ReLU on hidden layers
    o_ref[...] = jax.nn.sigmoid(h).astype(o_ref.dtype)       # exp routes to EUP


# ---------------------------------------------------------------------------
# Packing / tiling helpers (run once per parameter set, outside the hot path)
# ---------------------------------------------------------------------------

def _pack_params(weights, biases, matmul_dtype):
    """Pack per-layer [in, out] weights into one bf16 slab (per-layer padded) and
    biases into a small separate f32 slab (bias i at row 8*i, aligned reads)."""
    n_layers = len(weights)
    kpads = [_pad_dim(w.shape[0]) for w in weights]
    npads = [_pad_dim(w.shape[1]) for w in weights]
    max_n = max(npads)
    total_rows = sum(kpads)

    w_slab = jnp.zeros((total_rows, max_n), matmul_dtype)
    b_slab = jnp.zeros((8 * n_layers, max_n), jnp.float32)

    layer_meta = []
    roff = 0
    for i, (w, b) in enumerate(zip(weights, biases)):
        k, n = w.shape
        w_slab = w_slab.at[roff:roff + k, :n].set(w.astype(matmul_dtype))
        b_slab = b_slab.at[8 * i, :n].set(jnp.reshape(b, (-1,)).astype(jnp.float32))
        layer_meta.append((roff, kpads[i], npads[i]))
        roff += kpads[i]
    return w_slab, b_slab, tuple(layer_meta)


def _choose_batch_tiling(batch, tm_max=512):
    """Pick (tm, padded_batch, n_tiles): tm multiple of 16, minimal padding, and
    >= 2 grid steps when the batch allows it so the 'parallel' axis can shard
    across v7x's two TensorCores."""
    pb = _round_up(max(batch, 1), 16)
    n_tiles = -(-pb // tm_max)
    if pb >= 32:
        n_tiles = max(n_tiles, 2)
    tm = _round_up(-(-pb // n_tiles), 16)
    pb = n_tiles * tm
    return tm, pb, n_tiles


_SINGLE_BUFFER_OK = None


def _single_buffer_supported():
    """One-time probe: is pipeline_mode=pl.Buffered(1) (single-buffered constant
    blocks) supported AND correct on this jax/libtpu build?  Falls back to the
    default double-buffered spec otherwise."""
    global _SINGLE_BUFFER_OK
    if _SINGLE_BUFFER_OK is not None:
        return _SINGLE_BUFFER_OK
    try:
        def k(x_ref, w_ref, o_ref):
            o_ref[...] = x_ref[...] + w_ref[...]

        x = jnp.arange(16 * 128, dtype=jnp.float32).reshape(16, 128)
        w = jnp.ones((8, 128), jnp.float32)
        out = pl.pallas_call(
            k,
            out_shape=jax.ShapeDtypeStruct((16, 128), jnp.float32),
            grid=(2,),
            in_specs=[
                pl.BlockSpec((8, 128), lambda i: (i, 0)),
                pl.BlockSpec((8, 128), lambda i: (0, 0),
                             pipeline_mode=pl.Buffered(1)),
            ],
            out_specs=pl.BlockSpec((8, 128), lambda i: (i, 0)),
        )(x, w)
        _SINGLE_BUFFER_OK = bool(jnp.allclose(out, x + 1.0))
    except Exception:
        _SINGLE_BUFFER_OK = False
    return _SINGLE_BUFFER_OK


# ---------------------------------------------------------------------------
# Forward-pass factory
# ---------------------------------------------------------------------------

def make_actor_forward(weights, biases, *, tm_max=512, matmul_dtype=jnp.bfloat16):
    """Build the fused _ActorModel forward: [Linear+ReLU]*N -> Linear -> sigmoid.

    Packs parameters once (bf16 weight slab + f32 bias slab) and returns a
    jitted callable x[batch, *input_shape] -> probs[batch, out_actions].
    """
    assert len(weights) == len(biases) and len(weights) >= 1
    for i in range(1, len(weights)):
        assert weights[i].shape[0] == weights[i - 1].shape[1]

    in_features = weights[0].shape[0]
    out_features = weights[-1].shape[1]

    w_slab, b_slab, layer_meta = _pack_params(weights, biases, matmul_dtype)
    kpad0 = layer_meta[0][1]
    npad_last = layer_meta[-1][2]
    single_buffer = _single_buffer_supported()

    kernel = functools.partial(_actor_mlp_kernel, layer_meta, matmul_dtype)

    @jax.jit
    def forward(x, w_slab, b_slab):
        batch = x.shape[0]
        x2 = jnp.reshape(x, (batch, -1))            # flatten input_shape
        assert x2.shape[1] == in_features

        tm, pb, n_tiles = _choose_batch_tiling(batch, tm_max)
        x_pad = jnp.zeros((pb, kpad0), jnp.float32).at[:batch, :in_features].set(
            x2.astype(jnp.float32))

        wrows, max_n = w_slab.shape
        brows = b_slab.shape[0]

        const_kwargs = {}
        if single_buffer:
            const_kwargs = dict(pipeline_mode=pl.Buffered(1))

        # Advisory cost estimate for XLA scheduling around the custom call.
        flops = 2 * pb * sum(k * n for _, k, n in layer_meta)
        transcendentals = pb * npad_last
        bytes_accessed = (x_pad.size * 4
                          + w_slab.size * w_slab.dtype.itemsize
                          + b_slab.size * 4
                          + pb * npad_last * 4)

        # VMEM budget: double-buffered x/out tiles + (1 or 2)x resident params,
        # with generous margin; clamped to [32 MiB, 64 MiB] (v7x physical cap).
        param_bytes = w_slab.size * w_slab.dtype.itemsize + b_slab.size * 4
        tile_bytes = tm * (kpad0 + npad_last) * 4
        needed = 2 * tile_bytes + (1 if single_buffer else 2) * param_bytes
        vmem_limit = int(min(max(4 * needed, 32 << 20), 64 << 20))

        out_pad = pl.pallas_call(
            kernel,
            out_shape=jax.ShapeDtypeStruct((pb, npad_last), jnp.float32),
            grid_spec=pltpu.PrefetchScalarGridSpec(
                num_scalar_prefetch=0,
                grid=(n_tiles,),
                in_specs=[
                    pl.BlockSpec((tm, kpad0), lambda i: (i, 0)),            # x tile
                    pl.BlockSpec((wrows, max_n), lambda i: (0, 0),          # weights
                                 **const_kwargs),
                    pl.BlockSpec((brows, max_n), lambda i: (0, 0),          # biases
                                 **const_kwargs),
                ],
                out_specs=pl.BlockSpec((tm, npad_last), lambda i: (i, 0)),  # lane-dense
            ),
            compiler_params=pltpu.CompilerParams(
                dimension_semantics=("parallel",),
                vmem_limit_bytes=vmem_limit),
            cost_estimate=pl.CostEstimate(
                flops=flops,
                transcendentals=transcendentals,
                bytes_accessed=bytes_accessed),
        )(x_pad, w_slab, b_slab)

        return out_pad[:batch, :out_features]

    return lambda x: forward(jnp.asarray(x), w_slab, b_slab)


# ---------------------------------------------------------------------------
# Reference + init (for the self-test)
# ---------------------------------------------------------------------------

def _init_params(key, layer_sizes):
    """Deterministic PyTorch-Linear-like init (uniform +/- 1/sqrt(fan_in))."""
    weights, biases = [], []
    for fan_in, fan_out in zip(layer_sizes[:-1], layer_sizes[1:]):
        key, kw, kb = jax.random.split(key, 3)
        bound = 1.0 / jnp.sqrt(jnp.float32(fan_in))
        weights.append(jax.random.uniform(kw, (fan_in, fan_out), jnp.float32,
                                          -bound, bound))
        biases.append(jax.random.uniform(kb, (1, fan_out), jnp.float32,
                                         -bound, bound))
    return weights, biases


def _reference(x2d, weights, biases, matmul_dtype):
    """Pure-JAX reference with the same cast points as the kernel."""
    h = x2d.astype(jnp.float32)
    for i, (w, b) in enumerate(zip(weights, biases)):
        h = jnp.dot(h.astype(matmul_dtype), w.astype(matmul_dtype),
                    preferred_element_type=jnp.float32) + jnp.reshape(b, (1, -1))
        if i < len(weights) - 1:
            h = jnp.maximum(h, 0.0)
    return jax.nn.sigmoid(h)


if __name__ == "__main__":
    # network_config.input_shape = (4, 16)  -> in_features = 64
    # network_config['layers']   = [32, 32] -> two hidden Linear+ReLU layers
    # network_config.output_shape = (8,)    -> action layer out dim
    batch = 2
    input_shape = (4, 16)
    hidden_layers = [32, 32]
    out_actions = 8
    in_features = 1
    for d in input_shape:
        in_features *= d

    key = jax.random.PRNGKey(0)
    key, kx = jax.random.split(key)
    x = jax.random.normal(kx, (batch,) + input_shape, jnp.float32)

    layer_sizes = [in_features] + hidden_layers + [out_actions]
    weights, biases = _init_params(key, layer_sizes)

    actor_forward = make_actor_forward(weights, biases)

    out = jax.block_until_ready(actor_forward(x))
    assert out.shape == (batch, out_actions)

    # Tight check vs. a reference with identical mixed-precision semantics, and a
    # loose check vs. the pure-f32 PyTorch-equivalent forward (bf16 MXU error).
    x2d = x.reshape(batch, -1)
    ref_mixed = _reference(x2d, weights, biases, jnp.bfloat16)
    assert jnp.allclose(out, ref_mixed, atol=1e-4, rtol=1e-4)
    ref_f32 = _reference(x2d, weights, biases, jnp.float32)
    assert jnp.allclose(out, ref_f32, atol=5e-2)

    # Larger batch: exercises >1 grid step (megacore "parallel" sharding), the
    # padding-minimizing tm selection (batch=300 -> tm=160, pb=320) and slicing.
    key, kx2 = jax.random.split(key)
    big_batch = 300
    x_big = jax.random.normal(kx2, (big_batch,) + input_shape, jnp.float32)
    out_big = jax.block_until_ready(actor_forward(x_big))
    assert out_big.shape == (big_batch, out_actions)
    ref_big = _reference(x_big.reshape(big_batch, -1), weights, biases, jnp.bfloat16)
    assert jnp.allclose(out_big, ref_big, atol=1e-4, rtol=1e-4)

    print("KERNEL_OK")
</pallas_src>

<mosaic_0001>
module attributes {stable_mosaic.version = 11 : i64} {
  func.func @k(%arg0: i32, %arg1: memref<8x128xf32, #tpu.memory_space<vmem>>, %arg2: memref<8x128xf32, #tpu.memory_space<vmem>>, %arg3: memref<8x128xf32, #tpu.memory_space<vmem>>) attributes {dimension_semantics = [#tpu.dimension_semantics<arbitrary>], iteration_bounds = array<i64: 2>, scalar_prefetch = 0 : i64, scratch_operands = 0 : i64, tpu.core_type = #tpu.core_type<tc>, window_params = [{transform_indices = @transform_0, window_bounds = array<i64: 8, 128>}, {pipeline_mode = #tpu.pipeline_mode<synchronous>, transform_indices = @transform_1, window_bounds = array<i64: 8, 128>}, {transform_indices = @transform_2, window_bounds = array<i64: 8, 128>}]} {
    %c0 = arith.constant 0 : index
    %c0_0 = arith.constant 0 : index
    %0 = vector.load %arg1[%c0, %c0_0] : memref<8x128xf32, #tpu.memory_space<vmem>>, vector<8x128xf32>
    %c0_1 = arith.constant 0 : index
    %c0_2 = arith.constant 0 : index
    %1 = vector.load %arg2[%c0_1, %c0_2] : memref<8x128xf32, #tpu.memory_space<vmem>>, vector<8x128xf32>
    %2 = arith.addf %0, %1 : vector<8x128xf32>
    %c0_3 = arith.constant 0 : index
    %c0_4 = arith.constant 0 : index
    %3 = vector.load %arg3[%c0_3, %c0_4] : memref<8x128xf32, #tpu.memory_space<vmem>>, vector<8x128xf32>
    tpu.vector_store %arg3[%c0_3, %c0_4], %2 {strides = array<i32>} : memref<8x128xf32, #tpu.memory_space<vmem>>, vector<8x128xf32>,
    return
  }
  func.func @transform_0(%arg0: i32) -> (i32, i32) {
    %c0_i32 = arith.constant 0 : i32
    %c0_i32_0 = arith.constant 0 : i32
    return %arg0, %c0_i32 : i32, i32
  }
  func.func @transform_1(%arg0: i32) -> (i32, i32) {
    %c0_i32 = arith.constant 0 : i32
    %c0_i32_0 = arith.constant 0 : i32
    %c0_i32_1 = arith.constant 0 : i32
    return %c0_i32, %c0_i32_0 : i32, i32
  }
  func.func @transform_2(%arg0: i32) -> (i32, i32) {
    %c0_i32 = arith.constant 0 : i32
    %c0_i32_0 = arith.constant 0 : i32
    return %arg0, %c0_i32 : i32, i32
  }
}

module attributes {stable_mosaic.version = 11 : i64} {
  func.func @_actor_mlp_kernel(%arg0: i32, %arg1: memref<16x128xf32, #tpu.memory_space<vmem>>, %arg2: memref<384x128xbf16, #tpu.memory_space<vmem>>, %arg3: memref<24x128xf32, #tpu.memory_space<vmem>>, %arg4: memref<16x128xf32, #tpu.memory_space<vmem>>) attributes {dimension_semantics = [#tpu.dimension_semantics<parallel>], iteration_bounds = array<i64: 1>, scalar_prefetch = 0 : i64, scratch_operands = 0 : i64, tpu.core_type = #tpu.core_type<tc>, window_params = [{transform_indices = @transform_0, window_bounds = array<i64: 16, 128>}, {pipeline_mode = #tpu.pipeline_mode<synchronous>, transform_indices = @transform_1, window_bounds = array<i64: 384, 128>}, {pipeline_mode = #tpu.pipeline_mode<synchronous>, transform_indices = @transform_2, window_bounds = array<i64: 24, 128>}, {transform_indices = @transform_3, window_bounds = array<i64: 16, 128>}]} {
    %c0 = arith.constant 0 : index
    %c0_0 = arith.constant 0 : index
    %0 = vector.load %arg1[%c0, %c0_0] : memref<16x128xf32, #tpu.memory_space<vmem>>, vector<16x128xf32>
    %c0_1 = arith.constant 0 : index
    %c0_2 = arith.constant 0 : index
    %1 = vector.load %arg2[%c0_1, %c0_2] : memref<384x128xbf16, #tpu.memory_space<vmem>>, vector<128x128xbf16>
    %c0_3 = arith.constant 0 : index
    %c0_4 = arith.constant 0 : index
    %2 = vector.load %arg3[%c0_3, %c0_4] : memref<24x128xf32, #tpu.memory_space<vmem>>, vector<1x128xf32>
    %3 = arith.truncf %0 : vector<16x128xf32> to vector<16x128xbf16>
    %cst = arith.constant dense<0.000000e+00> : vector<16x128xf32>
    %4 = tpu.matmul %3, %1, %cst {dimension_numbers = #tpu.dot_dimension_numbers<[1], [0], [0], [1], [0, 0, 1, 1], [], []>} : vector<16x128xbf16>, vector<128x128xbf16>, vector<16x128xf32> -> vector<16x128xf32>
    %5 = vector.broadcast %2 : vector<1x128xf32> to vector<16x128xf32>
    %6 = arith.addf %4, %5 : vector<16x128xf32>
    %cst_5 = arith.constant 0.000000e+00 : f32
    %7 = vector.broadcast %cst_5 : f32 to vector<16x128xf32>
    %8 = arith.maximumf %6, %7 : vector<16x128xf32>
    %c128 = arith.constant 128 : index
    %c0_6 = arith.constant 0 : index
    %9 = vector.load %arg2[%c128, %c0_6] : memref<384x128xbf16, #tpu.memory_space<vmem>>, vector<128x128xbf16>
    %c8 = arith.constant 8 : index
    %c0_7 = arith.constant 0 : index
    %10 = vector.load %arg3[%c8, %c0_7] : memref<24x128xf32, #tpu.memory_space<vmem>>, vector<1x128xf32>
    %11 = arith.truncf %8 : vector<16x128xf32> to vector<16x128xbf16>
    %cst_8 = arith.constant dense<0.000000e+00> : vector<16x128xf32>
    %12 = tpu.matmul %11, %9, %cst_8 {dimension_numbers = #tpu.dot_dimension_numbers<[1], [0], [0], [1], [0, 0, 1, 1], [], []>} : vector<16x128xbf16>, vector<128x128xbf16>, vector<16x128xf32> -> vector<16x128xf32>
    %13 = vector.broadcast %10 : vector<1x128xf32> to vector<16x128xf32>
    %14 = arith.addf %12, %13 : vector<16x128xf32>
    %cst_9 = arith.constant 0.000000e+00 : f32
    %15 = vector.broadcast %cst_9 : f32 to vector<16x128xf32>
    %16 = arith.maximumf %14, %15 : vector<16x128xf32>
    %c256 = arith.constant 256 : index
    %c0_10 = arith.constant 0 : index
    %17 = vector.load %arg2[%c256, %c0_10] : memref<384x128xbf16, #tpu.memory_space<vmem>>, vector<128x128xbf16>
    %c16 = arith.constant 16 : index
    %c0_11 = arith.constant 0 : index
    %18 = vector.load %arg3[%c16, %c0_11] : memref<24x128xf32, #tpu.memory_space<vmem>>, vector<1x128xf32>
    %19 = arith.truncf %16 : vector<16x128xf32> to vector<16x128xbf16>
    %cst_12 = arith.constant dense<0.000000e+00> : vector<16x128xf32>
    %20 = tpu.matmul %19, %17, %cst_12 {dimension_numbers = #tpu.dot_dimension_numbers<[1], [0], [0], [1], [0, 0, 1, 1], [], []>} : vector<16x128xbf16>, vector<128x128xbf16>, vector<16x128xf32> -> vector<16x128xf32>
    %21 = vector.broadcast %18 : vector<1x128xf32> to vector<16x128xf32>
    %22 = arith.addf %20, %21 : vector<16x128xf32>
    %23 = arith.negf %22 : vector<16x128xf32>
    %24 = math.exp %23 : vector<16x128xf32>
    %cst_13 = arith.constant 1.000000e+00 : f32
    %25 = vector.broadcast %cst_13 : f32 to vector<16x128xf32>
    %26 = arith.addf %25, %24 : vector<16x128xf32>
    %27 = arith.divf %25, %26 : vector<16x128xf32>
    %c0_14 = arith.constant 0 : index
    %c0_15 = arith.constant 0 : index
    %28 = vector.load %arg4[%c0_14, %c0_15] : memref<16x128xf32, #tpu.memory_space<vmem>>, vector<16x128xf32>
    tpu.vector_store %arg4[%c0_14, %c0_15], %27 {strides = array<i32>} : memref<16x128xf32, #tpu.memory_space<vmem>>, vector<16x128xf32>,
    return
  }
  func.func @transform_0(%arg0: i32) -> (i32, i32) {
    %c0_i32 = arith.constant 0 : i32
    %c0_i32_0 = arith.constant 0 : i32
    return %arg0, %c0_i32 : i32, i32
  }
  func.func @transform_1(%arg0: i32) -> (i32, i32) {
    %c0_i32 = arith.constant 0 : i32
    %c0_i32_0 = arith.constant 0 : i32
    %c0_i32_1 = arith.constant 0 : i32
    return %c0_i32, %c0_i32_0 : i32, i32
  }
  func.func @transform_2(%arg0: i32) -> (i32, i32) {
    %c0_i32 = arith.constant 0 : i32
    %c0_i32_0 = arith.constant 0 : i32
    %c0_i32_1 = arith.constant 0 : i32
    return %c0_i32, %c0_i32_0 : i32, i32
  }
  func.func @transform_3(%arg0: i32) -> (i32, i32) {
    %c0_i32 = arith.constant 0 : i32
    %c0_i32_0 = arith.constant 0 : i32
    return %arg0, %c0_i32 : i32, i32
  }
}

</mosaic_0001>

<llo_original>
// kernel: tpu_custom_call.1
$region0: #{tpu_custom_call.1}
  #allocation0 [shape = 'u32[]', space=smem, size = 0x4, offset = 0x4, fixed_abs, tag = 'smem constant byte address 0x4 - core index']
  #allocation1 [shape = 'u32[144,128]{1,0:T(1,128)}', space=vmem, size = 0x12000, scoped, tag = 'internal scratch']
  %s0 = inlined_call_operand.hbm [shape: f32[16,128], index: 0, kind: input, shape index: {}]
  %s1 = inlined_call_operand.hbm [shape: f32[8,128], index: 1, kind: input, shape index: {}]
  %s2 = inlined_call_operand.hbm [shape: f32[16,128], index: 2, kind: output, shape index: {}]
  %s3 = sld [smem:[#allocation0]]
  $region49: #{tpu_custom_call.1} parent=0
    _
  %s5 = ssub.s32 1, %s3
  %s6 = scalar_select 0, %s5, %s3
  $region1: #{tpu_custom_call.1} parent=0
    #allocation2 [shape = 'u8[8192]{0}', space=vmem, size = 0x2000, scoped, tag = 'input window, operand 0']
    #allocation3 [shape = 's32[2]{0}', space=sflag, size = 0x8, scoped, tag = 'scoped memory for tpu_custom_call.1']
    #allocation4 [shape = 's32[2]{0}', space=sflag, size = 0x8, scoped, tag = 'scoped memory for tpu_custom_call.1']
    #allocation5 [shape = 'u8[4096]{0}', space=vmem, size = 0x1000, scoped, tag = 'input window, operand 1, single buffered']
    #allocation6 [shape = 's32[1]{0}', space=sflag, size = 0x4, scoped, tag = 'scoped memory for tpu_custom_call.1']
    #allocation7 [shape = 'u8[8192]{0}', space=vmem, size = 0x2000, scoped, tag = 'output window, operand 0']
    %7 = vsyncpa [#allocation3], 0
    %s8 = scalar_lea.sflag [#allocation3], 1
    %9 = vsyncpa %s8, 0
    %10 = vsyncpa [#allocation6], 0
    %11 = vsyncpa [#allocation4], 0
    %s12 = scalar_lea.sflag [#allocation4], 1
    %13 = vsyncpa %s12, 0
    loop: start=0, step=1, limit=4
    $region2: #{tpu_custom_call.1} parent=1 // loop_pre_header
      _
    $region3: #{tpu_custom_call.1} parent=1 // loop_header
      %s15 = sphi 0, %s19
      %p16 = scmp.ge.s32.totalorder %s15, 4
      %s25 = sphi 0, %s27
      %s28 = sphi 0, %s25
      %s29 = sphi 0, %s28
      %s45 = sphi 0, %s29
      %s49 = sphi 0, %s49
      %s51 = sphi 0, %s49
      %s52 = sphi 0, %s51
      %s66 = sphi 0, %s52
      %s72 = sphi 0, %s74
      %s75 = sphi 0, %s72
      %s76 = sphi 0, %s75
      %s92 = sphi 0, %s76
    $region4: #{tpu_custom_call.1} parent=1 // loop_header_branch
      %18 = sbr.rel (%p16) target = $region8
    $region5: #{tpu_custom_call.1} parent=1 // loop_body
      %s20 = ssub.s32 %s15, 1
      %s21 = ssub.s32 %s15, 2
      %s22 = sadd.s32 %s15, 1
      %s23 = ssub.s32 %s15, %s22
      %p24 = scmp.eq.s32.totalorder %s23, 0
      %s26 = sadd.s32 %s25, 1
      %s27 = scalar_select %p24, %s25, %s26
      %p30 = pneg %p24
      %p31 = scmp.eq.s32.totalorder %s15, 1
      %p32 = por %p30, %p31
      %p33 = scmp.ne.s32.totalorder %s25, %s28
      %p34 = scmp.eq.s32.totalorder %s15, 0
      %p35 = por %p33, %p34
      %p36 = scmp.ne.s32.totalorder %s25, %s28
      %p37 = scmp.eq.s32.totalorder %s20, 1
      %p38 = por %p36, %p37
      %p39 = scmp.ne.s32.totalorder %s28, %s29
      %p40 = scmp.eq.s32.totalorder %s20, 0
      %p41 = por %p39, %p40
      %p42 = scmp.ne.s32.totalorder %s28, %s29
      %p43 = scmp.eq.s32.totalorder %s21, 1
      %p44 = por %p42, %p43
      %p46 = scmp.ne.s32.totalorder %s29, %s45
      %p47 = scmp.eq.s32.totalorder %s21, 0
      %p48 = por %p46, %p47
      %s50 = sadd.s32 %s49, 1
      %p53 = scmp.eq.s32.totalorder %s15, 1
      %p54 = scmp.ne.s32.totalorder %s49, %s51
      %p55 = scmp.eq.s32.totalorder %s15, 0
      %p56 = por %p54, %p55
      %p57 = scmp.ne.s32.totalorder %s49, %s51
      %p58 = scmp.eq.s32.totalorder %s20, 1
      %p59 = por %p57, %p58
      %p60 = scmp.ne.s32.totalorder %s51, %s52
      %p61 = scmp.eq.s32.totalorder %s20, 0
      %p62 = por %p60, %p61
      %p63 = scmp.ne.s32.totalorder %s51, %s52
      %p64 = scmp.eq.s32.totalorder %s21, 1
      %p65 = por %p63, %p64
      %p67 = scmp.ne.s32.totalorder %s52, %s66
      %p68 = scmp.eq.s32.totalorder %s21, 0
      %p69 = por %p67, %p68
      %s70 = ssub.s32 %s15, %s22
      %p71 = scmp.eq.s32.totalorder %s70, 0
      %s73 = sadd.s32 %s72, 1
      %s74 = scalar_select %p71, %s72, %s73
      %p77 = pneg %p71
      %p78 = scmp.eq.s32.totalorder %s15, 1
      %p79 = por %p77, %p78
      %p80 = scmp.ne.s32.totalorder %s72, %s75
      %p81 = scmp.eq.s32.totalorder %s15, 0
      %p82 = por %p80, %p81
      %p83 = scmp.ne.s32.totalorder %s72, %s75
      %p84 = scmp.eq.s32.totalorder %s20, 1
      %p85 = por %p83, %p84
      %p86 = scmp.ne.s32.totalorder %s75, %s76
      %p87 = scmp.eq.s32.totalorder %s20, 0
      %p88 = por %p86, %p87
      %p89 = scmp.ne.s32.totalorder %s75, %s76
      %p90 = scmp.eq.s32.totalorder %s21, 1
      %p91 = por %p89, %p90
      %p93 = scmp.ne.s32.totalorder %s76, %s92
      %p94 = scmp.eq.s32.totalorder %s21, 0
      %p95 = por %p93, %p94
      %p96 = scmp.le.s32.totalorder 1, %s15
      %p97 = scmp.lt.s32.totalorder %s15, 3
      %p98 = pnand %p96, %p97
      %p99 = pneg %p98
      // Predicated region
      $region9: #{tpu_custom_call.1} parent=5 // pred_check
        _
      $region10: #{tpu_custom_call.1} parent=5 // pred_check_branch
        %101 = sbr.rel (%p98) target = $region12
      $region11: #{tpu_custom_call.1} parent=5 // pred_region
        %s102 = ssub.s32 %s15, 1
        // Predicated region
        $region13: #{tpu_custom_call.1} parent=11 // pred_check
          %p103 = pneg %p62
        $region14: #{tpu_custom_call.1} parent=11 // pred_check_branch
          %105 = sbr.rel (%p103) target = $region16
        $region15: #{tpu_custom_call.1} parent=11 // pred_region
          %s107 = ssub.s32 128, 128
          %108 = vsyncadd [#allocation6], %s107
          %s110 = sshll.u32 [#allocation5], 4
          %s111 = int_to_ptr.vmem [resolvable:$true] %s110
          %113 = dma.hbm_to_vmem [thread:$0]  %s1, 128, %s111, [#allocation6]
        $region16: #{tpu_custom_call.1} parent=11 // pred_fallthru
          _
      $region12: #{tpu_custom_call.1} parent=5 // pred_fallthru
        _
      %p114 = scmp.lt.s32.totalorder %s15, 2
      // Predicated region
      $region17: #{tpu_custom_call.1} parent=5 // pred_check
        %p115 = pneg %p114
      $region18: #{tpu_custom_call.1} parent=5 // pred_check_branch
        %117 = sbr.rel (%p115) target = $region20
      $region19: #{tpu_custom_call.1} parent=5 // pred_region
        // Predicated region
        $region21: #{tpu_custom_call.1} parent=19 // pred_check
          %p118 = pneg %p35
        $region22: #{tpu_custom_call.1} parent=19 // pred_check_branch
          %120 = sbr.rel (%p118) target = $region24
        $region23: #{tpu_custom_call.1} parent=19 // pred_region
          %s121 = sand.u32 %s25, 1
          %s122 = scalar_lea.sflag [#allocation3], %s121
          %s123 = sand.u32 %s25, 1
          %s124 = smul.addr %s123, 8
          %s125 = scalar_lea.vmem [#allocation2], %s124
          %s127 = ssub.s32 128, 128
          %128 = vsyncadd %s122, %s127
          %s129 = smul.addr %s15, 128
          %s130 = scalar_lea.hbm %s0, %s129
          %s132 = sshll.u32 %s125, 4
          %s133 = int_to_ptr.vmem [resolvable:$true] %s132
          %135 = dma.hbm_to_vmem [thread:$0]  %s130, 128, %s133, %s122
        $region24: #{tpu_custom_call.1} parent=19 // pred_fallthru
          _
      $region20: #{tpu_custom_call.1} parent=5 // pred_fallthru
        _
      %p136 = scmp.le.s32.totalorder 1, %s15
      %p137 = scmp.lt.s32.totalorder %s15, 3
      %p138 = pnand %p136, %p137
      %p139 = pneg %p138
      // Predicated region
      $region25: #{tpu_custom_call.1} parent=5 // pred_check
        _
      $region26: #{tpu_custom_call.1} parent=5 // pred_check_branch
        %141 = sbr.rel (%p138) target = $region28
      $region27: #{tpu_custom_call.1} parent=5 // pred_region
        %s142 = ssub.s32 %s15, 1
        %s143 = sand.u32 %s28, 1
        %s144 = scalar_lea.sflag [#allocation3], %s143
        %s145 = sand.u32 %s28, 1
        %s146 = smul.addr %s145, 8
        %s147 = scalar_lea.vmem [#allocation2], %s146
        // Predicated region
        $region29: #{tpu_custom_call.1} parent=27 // pred_check
          %p148 = pneg %p41
        $region30: #{tpu_custom_call.1} parent=27 // pred_check_branch
          %150 = sbr.rel (%p148) target = $region32
        $region31: #{tpu_custom_call.1} parent=27 // pred_region
          %151 = dma.done %s144, 128
        $region32: #{tpu_custom_call.1} parent=27 // pred_fallthru
          _
        // Predicated region
        $region33: #{tpu_custom_call.1} parent=27 // pred_check
          %p152 = pneg %p62
        $region34: #{tpu_custom_call.1} parent=27 // pred_check_branch
          %154 = sbr.rel (%p152) target = $region36
        $region35: #{tpu_custom_call.1} parent=27 // pred_region
          %155 = dma.done [#allocation6], 128
        $region36: #{tpu_custom_call.1} parent=27 // pred_fallthru
          _
        %s156 = sand.u32 %s28, 1
        %s157 = scalar_lea.sflag [#allocation3], %s156
        %s158 = sand.u32 %s28, 1
        %s159 = smul.addr %s158, 8
        %s160 = scalar_lea.vmem [#allocation2], %s159
        %p161 = pneg %p41
        %p162 = pneg %p38
        %p163 = pneg %p62
        %p164 = pneg %p59
        %p165 = pneg %p88
        %p166 = pneg %p85
        %s167 = sand.u32 %s75, 1
        %s168 = scalar_lea.sflag [#allocation4], %s167
        %s169 = sand.u32 %s75, 1
        %s170 = smul.addr %s169, 8
        %s171 = scalar_lea.vmem [#allocation7], %s170
        %v172 = vld [vmem:[%s147] sm:$0xff]
        %v173 = vld [vmem:[#allocation5] sm:$0xff]
        %v174 = vadd.f32 %v172, %v173
        %175 = vst [vmem:[%s171] sm:$0xff] %v174
        %s176 = sand.u32 %s75, 1
        %s177 = scalar_lea.sflag [#allocation4], %s176
        %s178 = sand.u32 %s75, 1
        %s179 = smul.addr %s178, 8
        %s180 = scalar_lea.vmem [#allocation7], %s179
        // Predicated region
        $region37: #{tpu_custom_call.1} parent=27 // pred_check
          %p181 = pneg %p85
        $region38: #{tpu_custom_call.1} parent=27 // pred_check_branch
          %183 = sbr.rel (%p181) target = $region40
        $region39: #{tpu_custom_call.1} parent=27 // pred_region
          %s185 = ssub.s32 128, 128
          %186 = vsyncadd %s177, %s185
          %s187 = smul.addr %s20, 128
          %s188 = scalar_lea.hbm %s2, %s187
          %s190 = sshll.u32 %s180, 4
          %s191 = int_to_ptr.vmem [resolvable:$true] %s190
          %193 = dma.vmem_to_hbm [thread:$0]  %s191, 128, %s188, %s177
        $region40: #{tpu_custom_call.1} parent=27 // pred_fallthru
          _
      $region28: #{tpu_custom_call.1} parent=5 // pred_fallthru
        _
      %p194 = scmp.le.s32.totalorder 2, %s15
      // Predicated region
      $region41: #{tpu_custom_call.1} parent=5 // pred_check
        %p195 = pneg %p194
      $region42: #{tpu_custom_call.1} parent=5 // pred_check_branch
        %197 = sbr.rel (%p195) target = $region44
      $region43: #{tpu_custom_call.1} parent=5 // pred_region
        %s198 = ssub.s32 %s15, 2
        // Predicated region
        $region45: #{tpu_custom_call.1} parent=43 // pred_check
          %p199 = pneg %p91
        $region46: #{tpu_custom_call.1} parent=43 // pred_check_branch
          %201 = sbr.rel (%p199) target = $region48
        $region47: #{tpu_custom_call.1} parent=43 // pred_region
          %s202 = sand.u32 %s76, 1
          %s203 = scalar_lea.sflag [#allocation4], %s202
          %s204 = sand.u32 %s76, 1
          %s205 = smul.addr %s204, 8
          %s206 = scalar_lea.vmem [#allocation7], %s205
          %207 = dma.done %s203, 128
        $region48: #{tpu_custom_call.1} parent=43 // pred_fallthru
          _
      $region44: #{tpu_custom_call.1} parent=5 // pred_fallthru
        _
    $region6: #{tpu_custom_call.1} parent=1 // loop_footer
      %s19 = sadd.s32 1, %s15
    $region7: #{tpu_custom_call.1} parent=1 // loop_footer_branch
      %14 = sbr.rel target = $region3
    $region8: #{tpu_custom_call.1} parent=1 // loop_exit
      _
    %208 = vsyncpa [#allocation3], 1
    %s209 = scalar_lea.sflag [#allocation3], 1
    %210 = vsyncpa %s209, 1
    %211 = vsyncpa [#allocation6], 1
    %212 = vsyncpa [#allocation4], 1
    %s213 = scalar_lea.sflag [#allocation4], 1
    %214 = vsyncpa %s213, 1

// kernel: forward.1
$region0: #{forward.1}
  #allocation0 [shape = 'u32[]', space=smem, size = 0x4, offset = 0x4, fixed_abs, tag = 'smem constant byte address 0x4 - core index']
  #allocation1 [shape = 'u32[144,128]{1,0:T(1,128)}', space=vmem, size = 0x12000, scoped, tag = 'internal scratch']
  %s0 = inlined_call_operand.vmem [shape: f32[16,128], index: 0, kind: input, shape index: {}]
  %s1 = inlined_call_operand.hbm [shape: bf16[384,128], index: 1, kind: input, shape index: {}]
  %s2 = inlined_call_operand.vmem [shape: f32[24,128], index: 2, kind: input, shape index: {}]
  %s3 = inlined_call_operand.vmem [shape: f32[16,128], index: 3, kind: output, shape index: {}]
  %s4 = sld [smem:[#allocation0]]
  $region26: #{forward.1} parent=0
    _
  %s6 = ssub.s32 1, %s4
  %s7 = scalar_select 0, %s6, %s4
  $region1: #{forward.1} parent=0
    #allocation2 [shape = 'u8[98304]{0}', space=vmem, size = 0x18000, scoped, tag = 'input window, operand 1, single buffered']
    #allocation3 [shape = 's32[1]{0}', space=sflag, size = 0x4, scoped, tag = 'scoped memory for forward.1']
    %8 = vsyncpa [#allocation3], 0
    // Predicated region
    $region2: #{forward.1} parent=1 // pred_check
      _
    $region3: #{forward.1} parent=1 // pred_check_branch
      %10 = sbr.rel (0) target = $region5
    $region4: #{forward.1} parent=1 // pred_region
      _
    $region5: #{forward.1} parent=1 // pred_fallthru
      _
    // Predicated region
    $region6: #{forward.1} parent=1 // pred_check
      _
    $region7: #{forward.1} parent=1 // pred_check_branch
      %12 = sbr.rel (0) target = $region9
    $region8: #{forward.1} parent=1 // pred_region
      %s14 = ssub.s32 3072, 3072
      %15 = vsyncadd [#allocation3], %s14
      %s16 = sshll.u32 [#allocation2], 4
      %s17 = int_to_ptr.vmem [resolvable:$true] %s16
      %22 = dma.hbm_to_vmem [thread:$0]  %s1, 3072, %s17, [#allocation3], 64, 64, 4
    $region9: #{forward.1} parent=1 // pred_fallthru
      _
    // Predicated region
    $region10: #{forward.1} parent=1 // pred_check
      _
    $region11: #{forward.1} parent=1 // pred_check_branch
      %24 = sbr.rel (0) target = $region13
    $region12: #{forward.1} parent=1 // pred_region
      _
    $region13: #{forward.1} parent=1 // pred_fallthru
      _
    // Predicated region
    $region14: #{forward.1} parent=1 // pred_check
      _
    $region15: #{forward.1} parent=1 // pred_check_branch
      %26 = sbr.rel (0) target = $region17
    $region16: #{forward.1} parent=1 // pred_region
      %27 = dma.done [#allocation3], 3072
    $region17: #{forward.1} parent=1 // pred_fallthru
      _
    %v29 = vld [vmem:[%s0] sm:$0xff]
    %v30 = vld [vmem:[%s0 + $0x8] sm:$0xff]
    %v31 = vld [vmem:[#allocation2] sm:$0xf]
    %v32 = vld [vmem:[#allocation2 + $0x4] sm:$0xf]
    %v33 = vld [vmem:[#allocation2 + $0x8] sm:$0xf]
    %v34 = vld [vmem:[#allocation2 + $0xc] sm:$0xf]
    %v35 = vld [vmem:[#allocation2 + $0x10] sm:$0xf]
    %v36 = vld [vmem:[#allocation2 + $0x14] sm:$0xf]
    %v37 = vld [vmem:[#allocation2 + $0x18] sm:$0xf]
    %v38 = vld [vmem:[#allocation2 + $0x1c] sm:$0xf]
    %v39 = vld [vmem:[#allocation2 + $0x20] sm:$0xf]
    %v40 = vld [vmem:[#allocation2 + $0x24] sm:$0xf]
    %v41 = vld [vmem:[#allocation2 + $0x28] sm:$0xf]
    %v42 = vld [vmem:[#allocation2 + $0x2c] sm:$0xf]
    %v43 = vld [vmem:[#allocation2 + $0x30] sm:$0xf]
    %v44 = vld [vmem:[#allocation2 + $0x34] sm:$0xf]
    %v45 = vld [vmem:[#allocation2 + $0x38] sm:$0xf]
    %v46 = vld [vmem:[#allocation2 + $0x3c] sm:$0xf]
    %v47 = vld [vmem:[%s2] sm:$0x1]
    %v48 = vpack.c.bf16 %v30, %v29
    %v49 = vlaneseq
    %v50 = vshrl.u32 %v49, 7
    %v51 = vsub.s32 0, %v50
    %v52 = vrot.slane %v47, %v51
    %v69 = vunpack.c.l.b16 %v31
    %v70 = vunpack.c.l.b16 %v32
    %v71 = vunpack.c.l.b16 %v33
    %v72 = vunpack.c.l.b16 %v34
    %v73 = vunpack.c.l.b16 %v35
    %v74 = vunpack.c.l.b16 %v36
    %v75 = vunpack.c.l.b16 %v37
    %v76 = vunpack.c.l.b16 %v38
    %v77 = vunpack.c.l.b16 %v39
    %v78 = vunpack.c.l.b16 %v40
    %v79 = vunpack.c.l.b16 %v41
    %v80 = vunpack.c.l.b16 %v42
    %v81 = vunpack.c.l.b16 %v43
    %v82 = vunpack.c.l.b16 %v44
    %v83 = vunpack.c.l.b16 %v45
    %v84 = vunpack.c.l.b16 %v46
    %v85 = vpack.c.b16 %v70, %v69
    %v86 = vpack.c.b16 %v72, %v71
    %v87 = vpack.c.b16 %v74, %v73
    %v88 = vpack.c.b16 %v76, %v75
    %v89 = vpack.c.b16 %v78, %v77
    %v90 = vpack.c.b16 %v80, %v79
    %v91 = vpack.c.b16 %v82, %v81
    %v92 = vpack.c.b16 %v84, %v83
    %101 = vmatprep.subr.bf16.mxu0 0
    %102 = vmatpush1.bf16.msra.mxu0 %v92
    %103 = vmatprep.subr.bf16.mxu0 0
    %104 = vmatpush1.bf16.msra.mxu0 %v91
    %105 = vmatprep.subr.bf16.mxu0 0
    %106 = vmatpush1.bf16.msra.mxu0 %v90
    %107 = vmatprep.subr.bf16.mxu0 0
    %108 = vmatpush1.bf16.msra.mxu0 %v89
    %109 = vmatprep.subr.bf16.mxu0 0
    %110 = vmatpush1.bf16.msra.mxu0 %v88
    %111 = vmatprep.subr.bf16.mxu0 0
    %112 = vmatpush1.bf16.msra.mxu0 %v87
    %113 = vmatprep.subr.bf16.mxu0 0
    %114 = vmatpush1.bf16.msra.mxu0 %v86
    %115 = vmatprep.subr.bf16.mxu0 0
    %116 = vmatpush1.bf16.msra.mxu0 %v85
    %117 = vmatprep.subr.bf16.mxu0 0
    %118 = vmatpush2.bf16.msra.mxu0 0
    %119 = vmatprep.subr.bf16.mxu0 0
    %120 = vmatpush2.bf16.msra.mxu0 0
    %121 = vmatprep.subr.bf16.mxu0 0
    %122 = vmatpush2.bf16.msra.mxu0 0
    %123 = vmatprep.subr.bf16.mxu0 0
    %124 = vmatpush2.bf16.msra.mxu0 0
    %125 = vmatprep.subr.bf16.mxu0 0
    %126 = vmatpush2.bf16.msra.mxu0 0
    %127 = vmatprep.subr.bf16.mxu0 0
    %128 = vmatpush2.bf16.msra.mxu0 0
    %129 = vmatprep.subr.bf16.mxu0 0
    %130 = vmatpush2.bf16.msra.mxu0 0
    %131 = vmatprep.subr.bf16.mxu0 0
    %132 = vmatpush2.bf16.msra.mxu0 0
    %133 = vmatprep.mubr.bf16.mxu0 0
    %134 = vmatmul.mubr.bf16.gmra.mxu0 %v48
    %v135 = vpop.f32.mrf.mxu0
    %v136 = vadd.f32 %v52, %v135
    %v137 = vpop.f32.mrf.mxu0
    %v138 = vpop.f32.mrf.mxu0
    %v139 = vadd.f32 %v52, %v138
    %v140 = vpop.f32.mrf.mxu0
    %141 = vdwg.mxu0
    %v142 = vmax.f32 %v136, 0.0
    %v143 = vmax.f32 %v139, 0.0
    %v144 = vld [vmem:[#allocation2 + $0x40] sm:$0xf]
    %v145 = vld [vmem:[#allocation2 + $0x44] sm:$0xf]
    %v146 = vld [vmem:[#allocation2 + $0x48] sm:$0xf]
    %v147 = vld [vmem:[#allocation2 + $0x4c] sm:$0xf]
    %v148 = vld [vmem:[#allocation2 + $0x50] sm:$0xf]
    %v149 = vld [vmem:[#allocation2 + $0x54] sm:$0xf]
    %v150 = vld [vmem:[#allocation2 + $0x58] sm:$0xf]
    %v151 = vld [vmem:[#allocation2 + $0x5c] sm:$0xf]
    %v152 = vld [vmem:[#allocation2 + $0x60] sm:$0xf]
    %v153 = vld [vmem:[#allocation2 + $0x64] sm:$0xf]
    %v154 = vld [vmem:[#allocation2 + $0x68] sm:$0xf]
    %v155 = vld [vmem:[#allocation2 + $0x6c] sm:$0xf]
    %v156 = vld [vmem:[#allocation2 + $0x70] sm:$0xf]
    %v157 = vld [vmem:[#allocation2 + $0x74] sm:$0xf]
    %v158 = vld [vmem:[#allocation2 + $0x78] sm:$0xf]
    %v159 = vld [vmem:[#allocation2 + $0x7c] sm:$0xf]
    %v160 = vld [vmem:[%s2 + $0x8] sm:$0x1]
    %v161 = vpack.c.bf16 %v143, %v142
    %v162 = vlaneseq
    %v163 = vshrl.u32 %v162, 7
    %v164 = vsub.s32 0, %v163
    %v165 = vrot.slane %v160, %v164
    %v182 = vunpack.c.l.b16 %v144
    %v183 = vunpack.c.l.b16 %v145
    %v184 = vunpack.c.l.b16 %v146
    %v185 = vunpack.c.l.b16 %v147
    %v186 = vunpack.c.l.b16 %v148
    %v187 = vunpack.c.l.b16 %v149
    %v188 = vunpack.c.l.b16 %v150
    %v189 = vunpack.c.l.b16 %v151
    %v190 = vunpack.c.l.b16 %v152
    %v191 = vunpack.c.l.b16 %v153
    %v192 = vunpack.c.l.b16 %v154
    %v193 = vunpack.c.l.b16 %v155
    %v194 = vunpack.c.l.b16 %v156
    %v195 = vunpack.c.l.b16 %v157
    %v196 = vunpack.c.l.b16 %v158
    %v197 = vunpack.c.l.b16 %v159
    %v198 = vpack.c.b16 %v183, %v182
    %v199 = vpack.c.b16 %v185, %v184
    %v200 = vpack.c.b16 %v187, %v186
    %v201 = vpack.c.b16 %v189, %v188
    %v202 = vpack.c.b16 %v191, %v190
    %v203 = vpack.c.b16 %v193, %v192
    %v204 = vpack.c.b16 %v195, %v194
    %v205 = vpack.c.b16 %v197, %v196
    %214 = vmatprep.subr.bf16.mxu0 0
    %215 = vmatpush1.bf16.msra.mxu0 %v205
    %216 = vmatprep.subr.bf16.mxu0 0
    %217 = vmatpush1.bf16.msra.mxu0 %v204
    %218 = vmatprep.subr.bf16.mxu0 0
    %219 = vmatpush1.bf16.msra.mxu0 %v203
    %220 = vmatprep.subr.bf16.mxu0 0
    %221 = vmatpush1.bf16.msra.mxu0 %v202
    %222 = vmatprep.subr.bf16.mxu0 0
    %223 = vmatpush1.bf16.msra.mxu0 %v201
    %224 = vmatprep.subr.bf16.mxu0 0
    %225 = vmatpush1.bf16.msra.mxu0 %v200
    %226 = vmatprep.subr.bf16.mxu0 0
    %227 = vmatpush1.bf16.msra.mxu0 %v199
    %228 = vmatprep.subr.bf16.mxu0 0
    %229 = vmatpush1.bf16.msra.mxu0 %v198
    %230 = vmatprep.subr.bf16.mxu0 0
    %231 = vmatpush2.bf16.msra.mxu0 0
    %232 = vmatprep.subr.bf16.mxu0 0
    %233 = vmatpush2.bf16.msra.mxu0 0
    %234 = vmatprep.subr.bf16.mxu0 0
    %235 = vmatpush2.bf16.msra.mxu0 0
    %236 = vmatprep.subr.bf16.mxu0 0
    %237 = vmatpush2.bf16.msra.mxu0 0
    %238 = vmatprep.subr.bf16.mxu0 0
    %239 = vmatpush2.bf16.msra.mxu0 0
    %240 = vmatprep.subr.bf16.mxu0 0
    %241 = vmatpush2.bf16.msra.mxu0 0
    %242 = vmatprep.subr.bf16.mxu0 0
    %243 = vmatpush2.bf16.msra.mxu0 0
    %244 = vmatprep.subr.bf16.mxu0 0
    %245 = vmatpush2.bf16.msra.mxu0 0
    %246 = vmatprep.mubr.bf16.mxu0 0
    %247 = vmatmul.mubr.bf16.gmra.mxu0 %v161
    %v248 = vpop.f32.mrf.mxu0
    %v249 = vadd.f32 %v165, %v248
    %v250 = vpop.f32.mrf.mxu0
    %v251 = vpop.f32.mrf.mxu0
    %v252 = vadd.f32 %v165, %v251
    %v253 = vpop.f32.mrf.mxu0
    %254 = vdwg.mxu0
    %v255 = vmax.f32 %v249, 0.0
    %v256 = vmax.f32 %v252, 0.0
    %v257 = vld [vmem:[#allocation2 + $0x80] sm:$0xf]
    %v258 = vld [vmem:[#allocation2 + $0x84] sm:$0xf]
    %v259 = vld [vmem:[#allocation2 + $0x88] sm:$0xf]
    %v260 = vld [vmem:[#allocation2 + $0x8c] sm:$0xf]
    %v261 = vld [vmem:[#allocation2 + $0x90] sm:$0xf]
    %v262 = vld [vmem:[#allocation2 + $0x94] sm:$0xf]
    %v263 = vld [vmem:[#allocation2 + $0x98] sm:$0xf]
    %v264 = vld [vmem:[#allocation2 + $0x9c] sm:$0xf]
    %v265 = vld [vmem:[#allocation2 + $0xa0] sm:$0xf]
    %v266 = vld [vmem:[#allocation2 + $0xa4] sm:$0xf]
    %v267 = vld [vmem:[#allocation2 + $0xa8] sm:$0xf]
    %v268 = vld [vmem:[#allocation2 + $0xac] sm:$0xf]
    %v269 = vld [vmem:[#allocation2 + $0xb0] sm:$0xf]
    %v270 = vld [vmem:[#allocation2 + $0xb4] sm:$0xf]
    %v271 = vld [vmem:[#allocation2 + $0xb8] sm:$0xf]
    %v272 = vld [vmem:[#allocation2 + $0xbc] sm:$0xf]
    %v273 = vld [vmem:[%s2 + $0x10] sm:$0x1]
    %v274 = vpack.c.bf16 %v256, %v255
    %v275 = vlaneseq
    %v276 = vshrl.u32 %v275, 7
    %v277 = vsub.s32 0, %v276
    %v278 = vrot.slane %v273, %v277
    %v295 = vunpack.c.l.b16 %v257
    %v296 = vunpack.c.l.b16 %v258
    %v297 = vunpack.c.l.b16 %v259
    %v298 = vunpack.c.l.b16 %v260
    %v299 = vunpack.c.l.b16 %v261
    %v300 = vunpack.c.l.b16 %v262
    %v301 = vunpack.c.l.b16 %v263
    %v302 = vunpack.c.l.b16 %v264
    %v303 = vunpack.c.l.b16 %v265
    %v304 = vunpack.c.l.b16 %v266
    %v305 = vunpack.c.l.b16 %v267
    %v306 = vunpack.c.l.b16 %v268
    %v307 = vunpack.c.l.b16 %v269
    %v308 = vunpack.c.l.b16 %v270
    %v309 = vunpack.c.l.b16 %v271
    %v310 = vunpack.c.l.b16 %v272
    %v311 = vpack.c.b16 %v296, %v295
    %v312 = vpack.c.b16 %v298, %v297
    %v313 = vpack.c.b16 %v300, %v299
    %v314 = vpack.c.b16 %v302, %v301
    %v315 = vpack.c.b16 %v304, %v303
    %v316 = vpack.c.b16 %v306, %v305
    %v317 = vpack.c.b16 %v308, %v307
    %v318 = vpack.c.b16 %v310, %v309
    %327 = vmatprep.subr.bf16.mxu0 0
    %328 = vmatpush1.bf16.msra.mxu0 %v318
    %329 = vmatprep.subr.bf16.mxu0 0
    %330 = vmatpush1.bf16.msra.mxu0 %v317
    %331 = vmatprep.subr.bf16.mxu0 0
    %332 = vmatpush1.bf16.msra.mxu0 %v316
    %333 = vmatprep.subr.bf16.mxu0 0
    %334 = vmatpush1.bf16.msra.mxu0 %v315
    %335 = vmatprep.subr.bf16.mxu0 0
    %336 = vmatpush1.bf16.msra.mxu0 %v314
    %337 = vmatprep.subr.bf16.mxu0 0
    %338 = vmatpush1.bf16.msra.mxu0 %v313
    %339 = vmatprep.subr.bf16.mxu0 0
    %340 = vmatpush1.bf16.msra.mxu0 %v312
    %341 = vmatprep.subr.bf16.mxu0 0
    %342 = vmatpush1.bf16.msra.mxu0 %v311
    %343 = vmatprep.subr.bf16.mxu0 0
    %344 = vmatpush2.bf16.msra.mxu0 0
    %345 = vmatprep.subr.bf16.mxu0 0
    %346 = vmatpush2.bf16.msra.mxu0 0
    %347 = vmatprep.subr.bf16.mxu0 0
    %348 = vmatpush2.bf16.msra.mxu0 0
    %349 = vmatprep.subr.bf16.mxu0 0
    %350 = vmatpush2.bf16.msra.mxu0 0
    %351 = vmatprep.subr.bf16.mxu0 0
    %352 = vmatpush2.bf16.msra.mxu0 0
    %353 = vmatprep.subr.bf16.mxu0 0
    %354 = vmatpush2.bf16.msra.mxu0 0
    %355 = vmatprep.subr.bf16.mxu0 0
    %356 = vmatpush2.bf16.msra.mxu0 0
    %357 = vmatprep.subr.bf16.mxu0 0
    %358 = vmatpush2.bf16.msra.mxu0 0
    %359 = vmatprep.mubr.bf16.mxu0 0
    %360 = vmatmul.mubr.bf16.gmra.mxu0 %v274
    %v361 = vpop.f32.mrf.mxu0
    %v362 = vadd.f32 %v278, %v361
    %v363 = vpop.f32.mrf.mxu0
    %v364 = vpop.f32.mrf.mxu0
    %v365 = vadd.f32 %v278, %v364
    %v366 = vpop.f32.mrf.mxu0
    %367 = vdwg.mxu0
    %v368 = vxor.u32 %v362, 2147483648
    %v369 = vxor.u32 %v365, 2147483648
    %v370 = vmul.f32 %v368, 1.442695
    %v371 = vpow.pop %v370
    %v372 = vmul.f32 %v369, 1.442695
    %v373 = vpow.pop %v372
    %v374 = vadd.f32 %v371, 1.0
    %v375 = vadd.f32 %v373, 1.0
    %v376 = vrcp.pop %v374
    %v377 = vmul.f32 1.0, %v376
    %v378 = vrcp.pop %v375
    %v379 = vmul.f32 1.0, %v378
    %380 = vst [vmem:[%s3] sm:$0xff] %v377
    %381 = vst [vmem:[%s3 + $0x8] sm:$0xff] %v379
    // Predicated region
    $region18: #{forward.1} parent=1 // pred_check
      _
    $region19: #{forward.1} parent=1 // pred_check_branch
      %383 = sbr.rel (0) target = $region21
    $region20: #{forward.1} parent=1 // pred_region
      _
    $region21: #{forward.1} parent=1 // pred_fallthru
      _
    // Predicated region
    $region22: #{forward.1} parent=1 // pred_check
      _
    $region23: #{forward.1} parent=1 // pred_check_branch
      %385 = sbr.rel (0) target = $region25
    $region24: #{forward.1} parent=1 // pred_region
      _
    $region25: #{forward.1} parent=1 // pred_fallthru
      _
    %386 = vsyncpa [#allocation3], 1

</llo_original>
